<compile_context>
chip_gen: v7x
topology: tpu7x:2x2x1
jax: 0.10.0
libtpu: 0.0.40
codegen_flags: <defaults>
</compile_context>

<pallas_src>
import functools

import jax
import jax.numpy as jnp
from jax.experimental import pallas as pl
from jax.experimental.pallas import tpu as pltpu


def _cw_loss_kernel(logits_ref, label_ref, loss_ref, *,
                    targeted: bool, confidence: float,
                    minimize: bool, total_rows: int):
    # Cast on the loaded tile (bf16 -> f32 happens in VMEM, not via an extra
    # XLA pass over HBM).
    logits = logits_ref[...].astype(jnp.float32)      # (TB, C) f32
    label = label_ref[...]                            # (TB, 1) i32
    tb, c = logits.shape

    # one-hot via iota + compare (no scatter on TPU); reuse the mask for both
    # row reductions and use the same masked-max pattern for each (XLU max).
    class_ids = jax.lax.broadcasted_iota(jnp.int32, (tb, c), dimension=1)
    is_target = class_ids == label                    # (TB, C) bool

    neg_inf = jnp.float32(-jnp.inf)
    target_logits = jnp.max(jnp.where(is_target, logits, neg_inf),
                            axis=1, keepdims=True)    # (TB, 1)
    other_max_logits = jnp.max(jnp.where(is_target, neg_inf, logits),
                               axis=1, keepdims=True)  # (TB, 1)

    if targeted:
        loss = jnp.maximum(other_max_logits - target_logits, -confidence)
    else:
        loss = jnp.maximum(target_logits - other_max_logits, -confidence)
        if not minimize:
            loss = -loss

    # Mask padded rows of the last (partial) batch tile to 0.
    row_ids = (pl.program_id(0) * tb
               + jax.lax.broadcasted_iota(jnp.int32, (tb, 1), dimension=0))
    loss_ref[...] = jnp.where(row_ids < total_rows, loss, 0.0)


def _pick_batch_tile(b: int, c: int, itemsize: int) -> int:
    """Batch tile: <=512 rows, ~2 MiB per logits buffer, multiple of 8."""
    budget = 2 * 1024 * 1024
    tb = budget // max(1, c * itemsize)
    tb = max(8, min(512, (tb // 8) * 8))
    if b <= tb:
        return b  # single tile; block shape == full array dims is allowed
    return tb


def cw_loss(logits, label, *, targeted=False, confidence=0.0,
            reduction="mean", minimize=True):
    """Pallas-TPU CW loss. logits: (B, C) any float dtype, label: (B,) int."""
    B, C = logits.shape
    label2d = label.reshape(B, 1).astype(jnp.int32)

    TB = _pick_batch_tile(B, C, logits.dtype.itemsize)
    num_tiles = pl.cdiv(B, TB)
    padded_B = num_tiles * TB

    kernel = functools.partial(
        _cw_loss_kernel,
        targeted=targeted,
        confidence=float(confidence),
        minimize=minimize,
        total_rows=B,
    )

    per_row = pl.pallas_call(
        kernel,
        out_shape=jax.ShapeDtypeStruct((padded_B, 1), jnp.float32),
        grid_spec=pltpu.PrefetchScalarGridSpec(
            num_scalar_prefetch=0,
            grid=(num_tiles,),
            in_specs=[
                pl.BlockSpec((TB, C), lambda i: (i, 0)),   # logits tile
                pl.BlockSpec((TB, 1), lambda i: (i, 0)),   # label tile
            ],
            out_specs=pl.BlockSpec((TB, 1), lambda i: (i, 0)),
        ),
        compiler_params=pltpu.CompilerParams(
            dimension_semantics=("parallel",)),
    )(logits, label2d)

    per_row = per_row[:B, 0]                            # drop tile padding
    if reduction == "sum":
        out = jnp.sum(per_row)
    elif reduction == "mean":
        out = jnp.sum(per_row) / B                      # divide by true B
    else:  # 'none'
        out = per_row
    return out.astype(logits.dtype)


def _cw_loss_ref(logits, label, *, targeted=False, confidence=0.0,
                 reduction="mean", minimize=True):
    """Pure-JAX reference mirroring the PyTorch forward."""
    B, C = logits.shape
    logits = logits.astype(jnp.float32)
    onehot = jax.nn.one_hot(label, C, dtype=jnp.bool_)
    target = jnp.max(jnp.where(onehot, logits, -jnp.inf), axis=1)
    other_max = jnp.max(jnp.where(onehot, -jnp.inf, logits), axis=1)
    if targeted:
        loss = jnp.maximum(other_max - target, -confidence)
    else:
        loss = jnp.maximum(target - other_max, -confidence)
        if not minimize:
            loss = -loss
    if reduction == "sum":
        return jnp.sum(loss)
    if reduction == "mean":
        return jnp.mean(loss)
    return loss


if __name__ == "__main__":
    key = jax.random.PRNGKey(0)
    k_logits, k_label = jax.random.split(key)

    B, C = 8, 16
    logits = jax.random.normal(k_logits, (B, C), dtype=jnp.float32) * 3.0
    label = jax.random.randint(k_label, (B,), 0, C, dtype=jnp.int32)

    # reduction='mean', untargeted (default config of the PyTorch module)
    out = cw_loss(logits, label, targeted=False, confidence=0.0,
                  reduction="mean", minimize=True)
    out = jax.block_until_ready(out)
    ref = _cw_loss_ref(logits, label, targeted=False, confidence=0.0,
                       reduction="mean", minimize=True)
    assert jnp.allclose(out, ref, atol=1e-5, rtol=1e-5), (out, ref)

    # reduction='sum', targeted
    out_s = jax.block_until_ready(
        cw_loss(logits, label, targeted=True, confidence=0.5, reduction="sum"))
    ref_s = _cw_loss_ref(logits, label, targeted=True, confidence=0.5,
                         reduction="sum")
    assert jnp.allclose(out_s, ref_s, atol=1e-5, rtol=1e-5), (out_s, ref_s)

    # reduction='none', untargeted, minimize=False
    out_n = jax.block_until_ready(
        cw_loss(logits, label, reduction="none", minimize=False))
    ref_n = _cw_loss_ref(logits, label, reduction="none", minimize=False)
    assert jnp.allclose(out_n, ref_n, atol=1e-5, rtol=1e-5), (out_n, ref_n)

    print("KERNEL_OK")
</pallas_src>

<mosaic_0001>
module attributes {stable_mosaic.version = 11 : i64} {
  func.func @_cw_loss_kernel(%arg0: i32, %arg1: memref<8x16xf32, #tpu.memory_space<vmem>>, %arg2: memref<8x1xi32, #tpu.memory_space<vmem>>, %arg3: memref<8x1xf32, #tpu.memory_space<vmem>>) attributes {dimension_semantics = [#tpu.dimension_semantics<parallel>], iteration_bounds = array<i64: 1>, scalar_prefetch = 0 : i64, scratch_operands = 0 : i64, tpu.core_type = #tpu.core_type<tc>, window_params = [{transform_indices = @transform_0, window_bounds = array<i64: 8, 16>}, {transform_indices = @transform_1, window_bounds = array<i64: 8, 1>}, {transform_indices = @transform_2, window_bounds = array<i64: 8, 1>}]} {
    %c0 = arith.constant 0 : index
    %c0_0 = arith.constant 0 : index
    %0 = vector.load %arg1[%c0, %c0_0] : memref<8x16xf32, #tpu.memory_space<vmem>>, vector<8x16xf32>
    %c0_1 = arith.constant 0 : index
    %c0_2 = arith.constant 0 : index
    %1 = vector.load %arg2[%c0_1, %c0_2] : memref<8x1xi32, #tpu.memory_space<vmem>>, vector<8x1xi32>
    %2 = tpu.iota {dimensions = array<i32: 1>} : vector<8x16xi32>
    %3 = vector.broadcast %1 : vector<8x1xi32> to vector<8x16xi32>
    %4 = arith.cmpi eq, %2, %3 : vector<8x16xi32>
    %cst = arith.constant 0xFF800000 : f32
    %5 = vector.broadcast %cst : f32 to vector<8x16xf32>
    %6 = arith.select %4, %0, %5 : vector<8x16xi1>, vector<8x16xf32>
    %cst_3 = arith.constant dense<0xFF800000> : vector<8xf32>
    %7 = vector.multi_reduction <maximumf>, %6, %cst_3 [1] : vector<8x16xf32> to vector<8xf32>
    %8 = vector.shape_cast %7 : vector<8xf32> to vector<8x1xf32>
    %cst_4 = arith.constant 0xFF800000 : f32
    %9 = vector.broadcast %cst_4 : f32 to vector<8x16xf32>
    %10 = arith.select %4, %9, %0 : vector<8x16xi1>, vector<8x16xf32>
    %cst_5 = arith.constant dense<0xFF800000> : vector<8xf32>
    %11 = vector.multi_reduction <maximumf>, %10, %cst_5 [1] : vector<8x16xf32> to vector<8xf32>
    %12 = vector.shape_cast %11 : vector<8xf32> to vector<8x1xf32>
    %13 = arith.subf %8, %12 : vector<8x1xf32>
    %cst_6 = arith.constant -0.000000e+00 : f32
    %14 = vector.broadcast %cst_6 : f32 to vector<8x1xf32>
    %15 = arith.maximumf %13, %14 : vector<8x1xf32>
    %c8_i32 = arith.constant 8 : i32
    %16 = arith.muli %arg0, %c8_i32 : i32
    %17 = tpu.iota {dimensions = array<i32: 0>} : vector<8x1xi32>
    %18 = vector.broadcast %16 : i32 to vector<8x1xi32>
    %19 = arith.addi %18, %17 : vector<8x1xi32>
    %c8_i32_7 = arith.constant 8 : i32
    %20 = vector.broadcast %c8_i32_7 : i32 to vector<8x1xi32>
    %21 = arith.cmpi slt, %19, %20 : vector<8x1xi32>
    %cst_8 = arith.constant 0.000000e+00 : f32
    %22 = vector.broadcast %cst_8 : f32 to vector<8x1xf32>
    %23 = arith.select %21, %15, %22 : vector<8x1xi1>, vector<8x1xf32>
    %c0_9 = arith.constant 0 : index
    %c0_10 = arith.constant 0 : index
    %24 = vector.load %arg3[%c0_9, %c0_10] : memref<8x1xf32, #tpu.memory_space<vmem>>, vector<8x1xf32>
    tpu.vector_store %arg3[%c0_9, %c0_10], %23 {strides = array<i32>} : memref<8x1xf32, #tpu.memory_space<vmem>>, vector<8x1xf32>,
    return
  }
  func.func @transform_0(%arg0: i32) -> (i32, i32) {
    %c0_i32 = arith.constant 0 : i32
    %c0_i32_0 = arith.constant 0 : i32
    return %arg0, %c0_i32 : i32, i32
  }
  func.func @transform_1(%arg0: i32) -> (i32, i32) {
    %c0_i32 = arith.constant 0 : i32
    %c0_i32_0 = arith.constant 0 : i32
    return %arg0, %c0_i32 : i32, i32
  }
  func.func @transform_2(%arg0: i32) -> (i32, i32) {
    %c0_i32 = arith.constant 0 : i32
    %c0_i32_0 = arith.constant 0 : i32
    return %arg0, %c0_i32 : i32, i32
  }
}

</mosaic_0001>

<llo_original>
// kernel: tpu_custom_call.1
$region0: #{tpu_custom_call.1}
  #allocation0 [shape = 'u32[]', space=smem, size = 0x4, offset = 0x4, fixed_abs, tag = 'smem constant byte address 0x4 - core index']
  #allocation1 [shape = 'u32[144,128]{1,0:T(1,128)}', space=vmem, size = 0x12000, scoped, tag = 'internal scratch']
  %s0 = inlined_call_operand.vmem [shape: f32[8,16], index: 0, kind: input, shape index: {}]
  %s1 = inlined_call_operand.vmem [shape: s32[8,1], index: 1, kind: input, shape index: {}]
  %s2 = inlined_call_operand.vmem [shape: f32[8,1], index: 2, kind: output, shape index: {}]
  %s3 = sld [smem:[#allocation0]]
  $region18: #{tpu_custom_call.1} parent=0
    _
  %s5 = ssub.s32 1, %s3
  %s6 = scalar_select 0, %s5, %s3
  // Predicated region
  $region2: #{tpu_custom_call.1} parent=0 // pred_check
    _
  $region3: #{tpu_custom_call.1} parent=0 // pred_check_branch
    %8 = sbr.rel (0) target = $region5
  $region4: #{tpu_custom_call.1} parent=0 // pred_region
    _
  $region5: #{tpu_custom_call.1} parent=0 // pred_fallthru
    _
  // Predicated region
  $region6: #{tpu_custom_call.1} parent=0 // pred_check
    _
  $region7: #{tpu_custom_call.1} parent=0 // pred_check_branch
    %10 = sbr.rel (0) target = $region9
  $region8: #{tpu_custom_call.1} parent=0 // pred_region
    _
  $region9: #{tpu_custom_call.1} parent=0 // pred_fallthru
    _
  %v11 = vld [vmem:[%s0] sm:$0xff]
  %v12 = vld [vmem:[%s1] sm:$0xff]
  %v13 = vlaneseq
  %v14 = vand.u32 %v13, 127
  %15 = vset.pattern.permute.xlu0 0
  %16 = vperm.xlu0 %15, %v12
  %v17 = vpop.permute.xlu0 %16
  %vm18 = vcmp.eq.s32.totalorder %v14, %v17
  %v19 = vsel %vm18, %v11, -inf
  %vm20 = vcmask 130048
  %v21 = vsel %vm20, %v19, -inf
  %22 = vmax.xlane.f32.xlu0 %v21
  %v23 = vpop.xlane.xlu0 %22
  %v24 = vsel %vm18, -inf, %v11
  %v25 = vsel %vm20, %v24, -inf
  %26 = vmax.xlane.f32.xlu0 %v25
  %v27 = vpop.xlane.xlu0 %26
  %v28 = vsub.f32 %v23, %v27
  %v29 = vmax.f32 %v28, -0.0
  %s30 = smul.u32 0, 8
  %v31 = vlaneseq
  %v32 = vshrl.u32 %v31, 7
  %v33 = vstv %s30
  %v34 = vadd.s32 %v33, %v32
  %vm35 = vcmp.lt.s32.totalorder %v34, 8
  %v36 = vsel %vm35, %v29, 0.0
  %vm37 = vcmask 7168
  %38 = vst.msk [vmem:[%s2] sm:$0xff] %vm37, %v36
  // Predicated region
  $region10: #{tpu_custom_call.1} parent=0 // pred_check
    _
  $region11: #{tpu_custom_call.1} parent=0 // pred_check_branch
    %40 = sbr.rel (0) target = $region13
  $region12: #{tpu_custom_call.1} parent=0 // pred_region
    _
  $region13: #{tpu_custom_call.1} parent=0 // pred_fallthru
    _
  // Predicated region
  $region14: #{tpu_custom_call.1} parent=0 // pred_check
    _
  $region15: #{tpu_custom_call.1} parent=0 // pred_check_branch
    %42 = sbr.rel (0) target = $region17
  $region16: #{tpu_custom_call.1} parent=0 // pred_region
    _
  $region17: #{tpu_custom_call.1} parent=0 // pred_fallthru
    _

</llo_original>
